<compile_context>
chip_gen: v7x
topology: tpu7x:2x2x1
jax: 0.10.0
libtpu: 0.0.40
codegen_flags: <defaults>
</compile_context>

<pallas_src>
import jax
import jax.numpy as jnp
from jax.experimental import pallas as pl
from jax.experimental.pallas import tpu as pltpu

EPS = 1e-6  # matches nn.LayerNorm(embedding_dim, eps=1e-06) in the module


def concat_fusion_kernel(x_ref, y_ref, b_ref, w_ref, out_ref):
    def normalize(v):
        # f32 statistics on the VPU/EUP; affine (gamma/beta) is folded into W/b.
        v = v.astype(jnp.float32)
        mean = jnp.mean(v, axis=-1, keepdims=True)
        centered = v - mean
        var = jnp.mean(centered * centered, axis=-1, keepdims=True)
        return centered * jax.lax.rsqrt(var + EPS)

    nx = normalize(x_ref[...]).astype(jnp.bfloat16)
    ny = normalize(y_ref[...]).astype(jnp.bfloat16)

    # Lane-axis concat (both halves are 128-multiples) -> single K=2D matmul.
    z = jnp.concatenate([nx, ny], axis=-1)                       # (bb, 2D) bf16
    acc = jnp.dot(z, w_ref[...], preferred_element_type=jnp.float32)
    out_ref[...] = (acc + b_ref[...]).astype(out_ref.dtype)


def prepare_params(params):
    """One-time prep: fold LayerNorm affine + Linear bias into the weight."""
    w = params["w"].astype(jnp.float32)            # (2D, D), pre-transposed
    gamma = params["gamma"].astype(jnp.float32)    # (D,)
    beta = params["beta"].astype(jnp.float32)      # (D,)
    bias = params["bias"].astype(jnp.float32)      # (D,)
    d = gamma.shape[0]

    # out = (n_x*g + b) @ W1 + (n_y*g + b) @ W2 + bias
    #     = n_x @ (g[:,None]*W1) + n_y @ (g[:,None]*W2) + (bias + b@(W1+W2))
    row_scale = jnp.concatenate([gamma, gamma])[:, None]          # (2D, 1)
    w_folded = (w * row_scale).astype(jnp.bfloat16)               # (2D, D)
    b_folded = (bias + beta @ (w[:d] + w[d:])).reshape(1, d)      # (1, D) f32
    return {"w": w_folded, "b": b_folded}


def concat_fusion_forward(x, y, prepped, *, block_b=512):
    B, D = x.shape
    assert y.shape == (B, D)
    assert D % 128 == 0, "embedding_dim must be a multiple of 128 (lane axis)"
    block_b = min(block_b, B)
    assert B % block_b == 0, "batch must be divisible by the batch tile"

    act_spec = pl.BlockSpec((block_b, D), lambda i: (i, 0))
    # Grid-invariant operands: single VMEM buffer instead of double-buffering.
    b_spec = pl.BlockSpec((1, D), lambda i: (0, 0), pipeline_mode=pl.Buffered(1))
    w_spec = pl.BlockSpec((2 * D, D), lambda i: (0, 0), pipeline_mode=pl.Buffered(1))

    itemsize = x.dtype.itemsize
    buf_bytes = (
        2 * 2 * block_b * D * itemsize    # x, y (double-buffered)
        + 2 * block_b * D * itemsize      # out (double-buffered)
        + 2 * D * D * 2                   # bf16 weight (single buffer)
        + D * 4                           # folded bias
        + block_b * 2 * D * 2             # in-kernel concat temp (bf16)
    )
    vmem_limit = min(128 * 1024 * 1024, max(4 * 1024 * 1024, 2 * buf_bytes))

    cost = pl.CostEstimate(
        flops=2 * B * (2 * D) * D + 8 * B * D,
        transcendentals=2 * B,  # one rsqrt per LayerNorm row
        bytes_accessed=3 * B * D * itemsize + 2 * D * D * 2 + D * 4,
    )

    return pl.pallas_call(
        concat_fusion_kernel,
        out_shape=jax.ShapeDtypeStruct((B, D), x.dtype),
        grid_spec=pltpu.PrefetchScalarGridSpec(
            num_scalar_prefetch=0,
            grid=(B // block_b,),
            in_specs=[act_spec, act_spec, b_spec, w_spec],
            out_specs=act_spec,
        ),
        compiler_params=pltpu.CompilerParams(
            dimension_semantics=("parallel",),
            vmem_limit_bytes=vmem_limit,
        ),
        cost_estimate=cost,
    )(x, y, prepped["b"], prepped["w"])


def init_params(key, d):
    # nn.Linear(2d, d) with xavier_normal_: std = sqrt(2 / (fan_in + fan_out)),
    # bias = 0.  Weight stored pre-transposed as [2d, d].
    std = (2.0 / (2 * d + d)) ** 0.5
    w = (std * jax.random.normal(key, (2 * d, d))).astype(jnp.float32)
    return {
        "w": w,
        "bias": jnp.zeros((d,), jnp.float32),
        "gamma": jnp.ones((d,), jnp.float32),   # LayerNorm default affine
        "beta": jnp.zeros((d,), jnp.float32),
    }


def concat_fusion_reference(x, y, p):
    def ln(v):
        mean = jnp.mean(v, axis=-1, keepdims=True)
        var = jnp.mean((v - mean) ** 2, axis=-1, keepdims=True)
        return (v - mean) / jnp.sqrt(var + EPS) * p["gamma"] + p["beta"]

    cat = jnp.concatenate([ln(x), ln(y)], axis=-1)
    return cat @ p["w"] + p["bias"]


if __name__ == "__main__":
    B, D = 256, 128  # batch, embedding_dim -> block_b=256, grid=(1,)
    key = jax.random.PRNGKey(0)
    kx, ky, kp = jax.random.split(key, 3)

    x = jax.random.normal(kx, (B, D), jnp.float32)
    y = jax.random.normal(ky, (B, D), jnp.float32)
    params = init_params(kp, D)
    prepped = prepare_params(params)   # one-time prep, off the hot path

    out = concat_fusion_forward(x, y, prepped)
    out = jax.block_until_ready(out)

    ref = concat_fusion_reference(x, y, params)
    assert out.shape == (B, D)
    # bf16 MXU operands with f32 accumulation -> ~1e-2-level tolerance.
    assert jnp.allclose(out, ref, atol=5e-2, rtol=5e-2), "mismatch vs reference"

    print("KERNEL_OK")
</pallas_src>

<mosaic_0001>
module attributes {stable_mosaic.version = 11 : i64} {
  func.func @concat_fusion_kernel(%arg0: i32, %arg1: memref<256x128xf32, #tpu.memory_space<vmem>>, %arg2: memref<256x128xf32, #tpu.memory_space<vmem>>, %arg3: memref<1x128xf32, #tpu.memory_space<vmem>>, %arg4: memref<256x128xbf16, #tpu.memory_space<vmem>>, %arg5: memref<256x128xf32, #tpu.memory_space<vmem>>) attributes {dimension_semantics = [#tpu.dimension_semantics<parallel>], iteration_bounds = array<i64: 1>, scalar_prefetch = 0 : i64, scratch_operands = 0 : i64, tpu.core_type = #tpu.core_type<tc>, window_params = [{transform_indices = @transform_0, window_bounds = array<i64: 256, 128>}, {transform_indices = @transform_1, window_bounds = array<i64: 256, 128>}, {pipeline_mode = #tpu.pipeline_mode<synchronous>, transform_indices = @transform_2, window_bounds = array<i64: 1, 128>}, {pipeline_mode = #tpu.pipeline_mode<synchronous>, transform_indices = @transform_3, window_bounds = array<i64: 256, 128>}, {transform_indices = @transform_4, window_bounds = array<i64: 256, 128>}]} {
    %c0 = arith.constant 0 : index
    %c0_0 = arith.constant 0 : index
    %0 = vector.load %arg1[%c0, %c0_0] : memref<256x128xf32, #tpu.memory_space<vmem>>, vector<256x128xf32>
    %cst = arith.constant dense<0.000000e+00> : vector<256xf32>
    %1 = vector.multi_reduction <add>, %0, %cst [1] : vector<256x128xf32> to vector<256xf32>
    %2 = vector.shape_cast %1 : vector<256xf32> to vector<256x1xf32>
    %cst_1 = arith.constant 1.280000e+02 : f32
    %3 = vector.broadcast %cst_1 : f32 to vector<256x1xf32>
    %4 = arith.divf %2, %3 : vector<256x1xf32>
    %5 = vector.broadcast %4 : vector<256x1xf32> to vector<256x128xf32>
    %6 = arith.subf %0, %5 : vector<256x128xf32>
    %7 = arith.mulf %6, %6 : vector<256x128xf32>
    %cst_2 = arith.constant dense<0.000000e+00> : vector<256xf32>
    %8 = vector.multi_reduction <add>, %7, %cst_2 [1] : vector<256x128xf32> to vector<256xf32>
    %9 = vector.shape_cast %8 : vector<256xf32> to vector<256x1xf32>
    %cst_3 = arith.constant 1.280000e+02 : f32
    %10 = vector.broadcast %cst_3 : f32 to vector<256x1xf32>
    %11 = arith.divf %9, %10 : vector<256x1xf32>
    %cst_4 = arith.constant 9.99999997E-7 : f32
    %12 = vector.broadcast %cst_4 : f32 to vector<256x1xf32>
    %13 = arith.addf %11, %12 : vector<256x1xf32>
    %14 = math.rsqrt %13 : vector<256x1xf32>
    %15 = vector.broadcast %14 : vector<256x1xf32> to vector<256x128xf32>
    %16 = arith.mulf %6, %15 : vector<256x128xf32>
    %17 = arith.truncf %16 : vector<256x128xf32> to vector<256x128xbf16>
    %c0_5 = arith.constant 0 : index
    %c0_6 = arith.constant 0 : index
    %18 = vector.load %arg2[%c0_5, %c0_6] : memref<256x128xf32, #tpu.memory_space<vmem>>, vector<256x128xf32>
    %cst_7 = arith.constant dense<0.000000e+00> : vector<256xf32>
    %19 = vector.multi_reduction <add>, %18, %cst_7 [1] : vector<256x128xf32> to vector<256xf32>
    %20 = vector.shape_cast %19 : vector<256xf32> to vector<256x1xf32>
    %cst_8 = arith.constant 1.280000e+02 : f32
    %21 = vector.broadcast %cst_8 : f32 to vector<256x1xf32>
    %22 = arith.divf %20, %21 : vector<256x1xf32>
    %23 = vector.broadcast %22 : vector<256x1xf32> to vector<256x128xf32>
    %24 = arith.subf %18, %23 : vector<256x128xf32>
    %25 = arith.mulf %24, %24 : vector<256x128xf32>
    %cst_9 = arith.constant dense<0.000000e+00> : vector<256xf32>
    %26 = vector.multi_reduction <add>, %25, %cst_9 [1] : vector<256x128xf32> to vector<256xf32>
    %27 = vector.shape_cast %26 : vector<256xf32> to vector<256x1xf32>
    %cst_10 = arith.constant 1.280000e+02 : f32
    %28 = vector.broadcast %cst_10 : f32 to vector<256x1xf32>
    %29 = arith.divf %27, %28 : vector<256x1xf32>
    %cst_11 = arith.constant 9.99999997E-7 : f32
    %30 = vector.broadcast %cst_11 : f32 to vector<256x1xf32>
    %31 = arith.addf %29, %30 : vector<256x1xf32>
    %32 = math.rsqrt %31 : vector<256x1xf32>
    %33 = vector.broadcast %32 : vector<256x1xf32> to vector<256x128xf32>
    %34 = arith.mulf %24, %33 : vector<256x128xf32>
    %35 = arith.truncf %34 : vector<256x128xf32> to vector<256x128xbf16>
    %36 = tpu.concatenate %17, %35 in 1 : vector<256x128xbf16>, vector<256x128xbf16> -> vector<256x256xbf16>
    %c0_12 = arith.constant 0 : index
    %c0_13 = arith.constant 0 : index
    %37 = vector.load %arg4[%c0_12, %c0_13] : memref<256x128xbf16, #tpu.memory_space<vmem>>, vector<256x128xbf16>
    %cst_14 = arith.constant dense<0.000000e+00> : vector<256x128xf32>
    %38 = tpu.matmul %36, %37, %cst_14 {dimension_numbers = #tpu.dot_dimension_numbers<[1], [0], [0], [1], [0, 0, 1, 1], [], []>} : vector<256x256xbf16>, vector<256x128xbf16>, vector<256x128xf32> -> vector<256x128xf32>
    %c0_15 = arith.constant 0 : index
    %c0_16 = arith.constant 0 : index
    %39 = vector.load %arg3[%c0_15, %c0_16] : memref<1x128xf32, #tpu.memory_space<vmem>>, vector<1x128xf32>
    %40 = vector.broadcast %39 : vector<1x128xf32> to vector<256x128xf32>
    %41 = arith.addf %38, %40 : vector<256x128xf32>
    %c0_17 = arith.constant 0 : index
    %c0_18 = arith.constant 0 : index
    %42 = vector.load %arg5[%c0_17, %c0_18] : memref<256x128xf32, #tpu.memory_space<vmem>>, vector<256x128xf32>
    tpu.vector_store %arg5[%c0_17, %c0_18], %41 {strides = array<i32>} : memref<256x128xf32, #tpu.memory_space<vmem>>, vector<256x128xf32>,
    return
  }
  func.func @transform_0(%arg0: i32) -> (i32, i32) {
    %c0_i32 = arith.constant 0 : i32
    %c0_i32_0 = arith.constant 0 : i32
    return %arg0, %c0_i32 : i32, i32
  }
  func.func @transform_1(%arg0: i32) -> (i32, i32) {
    %c0_i32 = arith.constant 0 : i32
    %c0_i32_0 = arith.constant 0 : i32
    return %arg0, %c0_i32 : i32, i32
  }
  func.func @transform_2(%arg0: i32) -> (i32, i32) {
    %c0_i32 = arith.constant 0 : i32
    %c0_i32_0 = arith.constant 0 : i32
    %c0_i32_1 = arith.constant 0 : i32
    return %c0_i32, %c0_i32_0 : i32, i32
  }
  func.func @transform_3(%arg0: i32) -> (i32, i32) {
    %c0_i32 = arith.constant 0 : i32
    %c0_i32_0 = arith.constant 0 : i32
    %c0_i32_1 = arith.constant 0 : i32
    return %c0_i32, %c0_i32_0 : i32, i32
  }
  func.func @transform_4(%arg0: i32) -> (i32, i32) {
    %c0_i32 = arith.constant 0 : i32
    %c0_i32_0 = arith.constant 0 : i32
    return %arg0, %c0_i32 : i32, i32
  }
}

</mosaic_0001>

<llo_original>
// kernel: tpu_custom_call.1
$region0: #{tpu_custom_call.1}
  #allocation0 [shape = 'u32[]', space=smem, size = 0x4, offset = 0x4, fixed_abs, tag = 'smem constant byte address 0x4 - core index']
  #allocation1 [shape = 'u32[144,128]{1,0:T(1,128)}', space=vmem, size = 0x12000, scoped, tag = 'internal scratch']
  %s0 = inlined_call_operand.hbm [shape: f32[256,128], index: 0, kind: input, shape index: {}]
  %s1 = inlined_call_operand.hbm [shape: f32[256,128], index: 1, kind: input, shape index: {}]
  %s2 = inlined_call_operand.vmem [shape: f32[1,128], index: 2, kind: input, shape index: {}]
  %s3 = inlined_call_operand.hbm [shape: bf16[256,128], index: 3, kind: input, shape index: {}]
  %s4 = inlined_call_operand.hbm [shape: f32[256,128], index: 4, kind: output, shape index: {}]
  %s5 = sld [smem:[#allocation0]]
  $region38: #{tpu_custom_call.1} parent=0
    _
  %s7 = ssub.s32 1, %s5
  %s8 = scalar_select 0, %s7, %s5
  $region1: #{tpu_custom_call.1} parent=0
    #allocation2 [shape = 'u8[131072]{0}', space=vmem, size = 0x20000, scoped, tag = 'input window, operand 0, single buffered']
    #allocation3 [shape = 's32[1]{0}', space=sflag, size = 0x4, scoped, tag = 'scoped memory for tpu_custom_call.1']
    #allocation4 [shape = 's32[1]{0}', space=sflag, size = 0x4, scoped, tag = 'scoped memory for tpu_custom_call.1']
    #allocation5 [shape = 'u8[131072]{0}', space=vmem, size = 0x20000, scoped, tag = 'input window, operand 1, single buffered']
    #allocation6 [shape = 's32[1]{0}', space=sflag, size = 0x4, scoped, tag = 'scoped memory for tpu_custom_call.1']
    #allocation7 [shape = 'u8[65536]{0}', space=vmem, size = 0x10000, scoped, tag = 'input window, operand 3, single buffered']
    #allocation8 [shape = 'u8[131072]{0}', space=vmem, size = 0x20000, scoped, tag = 'output window, operand 0, single buffered']
    %9 = vsyncpa [#allocation3], 0
    %10 = vsyncpa [#allocation6], 0
    %11 = vsyncpa [#allocation4], 0
    // Predicated region
    $region2: #{tpu_custom_call.1} parent=1 // pred_check
      _
    $region3: #{tpu_custom_call.1} parent=1 // pred_check_branch
      %13 = sbr.rel (0) target = $region5
    $region4: #{tpu_custom_call.1} parent=1 // pred_region
      %s15 = ssub.s32 4096, 4096
      %16 = vsyncadd [#allocation3], %s15
      %s17 = sshll.u32 [#allocation2], 4
      %s18 = int_to_ptr.vmem [resolvable:$true] %s17
      %23 = dma.hbm_to_vmem [thread:$0]  %s0, 4096, %s18, [#allocation3], 128, 128, 8
    $region5: #{tpu_custom_call.1} parent=1 // pred_fallthru
      _
    // Predicated region
    $region6: #{tpu_custom_call.1} parent=1 // pred_check
      _
    $region7: #{tpu_custom_call.1} parent=1 // pred_check_branch
      %25 = sbr.rel (0) target = $region9
    $region8: #{tpu_custom_call.1} parent=1 // pred_region
      %s27 = ssub.s32 4096, 4096
      %28 = vsyncadd [#allocation6], %s27
      %s29 = sshll.u32 [#allocation5], 4
      %s30 = int_to_ptr.vmem [resolvable:$true] %s29
      %35 = dma.hbm_to_vmem [thread:$0]  %s1, 4096, %s30, [#allocation6], 128, 128, 8
    $region9: #{tpu_custom_call.1} parent=1 // pred_fallthru
      _
    // Predicated region
    $region10: #{tpu_custom_call.1} parent=1 // pred_check
      _
    $region11: #{tpu_custom_call.1} parent=1 // pred_check_branch
      %37 = sbr.rel (0) target = $region13
    $region12: #{tpu_custom_call.1} parent=1 // pred_region
      _
    $region13: #{tpu_custom_call.1} parent=1 // pred_fallthru
      _
    // Predicated region
    $region14: #{tpu_custom_call.1} parent=1 // pred_check
      _
    $region15: #{tpu_custom_call.1} parent=1 // pred_check_branch
      %39 = sbr.rel (0) target = $region17
    $region16: #{tpu_custom_call.1} parent=1 // pred_region
      %s41 = ssub.s32 2048, 2048
      %42 = vsyncadd [#allocation6], %s41
      %s43 = sshll.u32 [#allocation7], 4
      %s44 = int_to_ptr.vmem [resolvable:$true] %s43
      %49 = dma.hbm_to_vmem [thread:$0]  %s3, 2048, %s44, [#allocation6], 64, 64, 4
    $region17: #{tpu_custom_call.1} parent=1 // pred_fallthru
      _
    // Predicated region
    $region18: #{tpu_custom_call.1} parent=1 // pred_check
      _
    $region19: #{tpu_custom_call.1} parent=1 // pred_check_branch
      %51 = sbr.rel (0) target = $region21
    $region20: #{tpu_custom_call.1} parent=1 // pred_region
      %52 = dma.done [#allocation3], 4096
    $region21: #{tpu_custom_call.1} parent=1 // pred_fallthru
      _
    // Predicated region
    $region22: #{tpu_custom_call.1} parent=1 // pred_check
      _
    $region23: #{tpu_custom_call.1} parent=1 // pred_check_branch
      %54 = sbr.rel (0) target = $region25
    $region24: #{tpu_custom_call.1} parent=1 // pred_region
      %55 = dma.done [#allocation6], 4096
    $region25: #{tpu_custom_call.1} parent=1 // pred_fallthru
      _
    // Predicated region
    $region26: #{tpu_custom_call.1} parent=1 // pred_check
      _
    $region27: #{tpu_custom_call.1} parent=1 // pred_check_branch
      %57 = sbr.rel (0) target = $region29
    $region28: #{tpu_custom_call.1} parent=1 // pred_region
      %58 = dma.done [#allocation6], 2048
    $region29: #{tpu_custom_call.1} parent=1 // pred_fallthru
      _
    %v60 = vld [vmem:[#allocation2] sm:$0xff]
    %v61 = vld [vmem:[#allocation2 + $0x8] sm:$0xff]
    %v62 = vld [vmem:[#allocation2 + $0x10] sm:$0xff]
    %v63 = vld [vmem:[#allocation2 + $0x18] sm:$0xff]
    %v64 = vld [vmem:[#allocation2 + $0x20] sm:$0xff]
    %v65 = vld [vmem:[#allocation2 + $0x28] sm:$0xff]
    %v66 = vld [vmem:[#allocation2 + $0x30] sm:$0xff]
    %v67 = vld [vmem:[#allocation2 + $0x38] sm:$0xff]
    %v68 = vld [vmem:[#allocation2 + $0x40] sm:$0xff]
    %v69 = vld [vmem:[#allocation2 + $0x48] sm:$0xff]
    %v70 = vld [vmem:[#allocation2 + $0x50] sm:$0xff]
    %v71 = vld [vmem:[#allocation2 + $0x58] sm:$0xff]
    %v72 = vld [vmem:[#allocation2 + $0x60] sm:$0xff]
    %v73 = vld [vmem:[#allocation2 + $0x68] sm:$0xff]
    %v74 = vld [vmem:[#allocation2 + $0x70] sm:$0xff]
    %v75 = vld [vmem:[#allocation2 + $0x78] sm:$0xff]
    %v76 = vld [vmem:[#allocation2 + $0x80] sm:$0xff]
    %v77 = vld [vmem:[#allocation2 + $0x88] sm:$0xff]
    %v78 = vld [vmem:[#allocation2 + $0x90] sm:$0xff]
    %v79 = vld [vmem:[#allocation2 + $0x98] sm:$0xff]
    %v80 = vld [vmem:[#allocation2 + $0xa0] sm:$0xff]
    %v81 = vld [vmem:[#allocation2 + $0xa8] sm:$0xff]
    %v82 = vld [vmem:[#allocation2 + $0xb0] sm:$0xff]
    %v83 = vld [vmem:[#allocation2 + $0xb8] sm:$0xff]
    %v84 = vld [vmem:[#allocation2 + $0xc0] sm:$0xff]
    %v85 = vld [vmem:[#allocation2 + $0xc8] sm:$0xff]
    %v86 = vld [vmem:[#allocation2 + $0xd0] sm:$0xff]
    %v87 = vld [vmem:[#allocation2 + $0xd8] sm:$0xff]
    %v88 = vld [vmem:[#allocation2 + $0xe0] sm:$0xff]
    %v89 = vld [vmem:[#allocation2 + $0xe8] sm:$0xff]
    %v90 = vld [vmem:[#allocation2 + $0xf0] sm:$0xff]
    %v91 = vld [vmem:[#allocation2 + $0xf8] sm:$0xff]
    %92 = vadd.xlane.f32.xlu0 %v60
    %v93 = vpop.xlane.xlu0 %92
    %94 = vadd.xlane.f32.xlu0 %v61
    %v95 = vpop.xlane.xlu0 %94
    %96 = vadd.xlane.f32.xlu0 %v62
    %v97 = vpop.xlane.xlu0 %96
    %98 = vadd.xlane.f32.xlu0 %v63
    %v99 = vpop.xlane.xlu0 %98
    %100 = vadd.xlane.f32.xlu0 %v64
    %v101 = vpop.xlane.xlu0 %100
    %102 = vadd.xlane.f32.xlu0 %v65
    %v103 = vpop.xlane.xlu0 %102
    %104 = vadd.xlane.f32.xlu0 %v66
    %v105 = vpop.xlane.xlu0 %104
    %106 = vadd.xlane.f32.xlu0 %v67
    %v107 = vpop.xlane.xlu0 %106
    %108 = vadd.xlane.f32.xlu0 %v68
    %v109 = vpop.xlane.xlu0 %108
    %110 = vadd.xlane.f32.xlu0 %v69
    %v111 = vpop.xlane.xlu0 %110
    %112 = vadd.xlane.f32.xlu0 %v70
    %v113 = vpop.xlane.xlu0 %112
    %114 = vadd.xlane.f32.xlu0 %v71
    %v115 = vpop.xlane.xlu0 %114
    %116 = vadd.xlane.f32.xlu0 %v72
    %v117 = vpop.xlane.xlu0 %116
    %118 = vadd.xlane.f32.xlu0 %v73
    %v119 = vpop.xlane.xlu0 %118
    %120 = vadd.xlane.f32.xlu0 %v74
    %v121 = vpop.xlane.xlu0 %120
    %122 = vadd.xlane.f32.xlu0 %v75
    %v123 = vpop.xlane.xlu0 %122
    %124 = vadd.xlane.f32.xlu0 %v76
    %v125 = vpop.xlane.xlu0 %124
    %126 = vadd.xlane.f32.xlu0 %v77
    %v127 = vpop.xlane.xlu0 %126
    %128 = vadd.xlane.f32.xlu0 %v78
    %v129 = vpop.xlane.xlu0 %128
    %130 = vadd.xlane.f32.xlu0 %v79
    %v131 = vpop.xlane.xlu0 %130
    %132 = vadd.xlane.f32.xlu0 %v80
    %v133 = vpop.xlane.xlu0 %132
    %134 = vadd.xlane.f32.xlu0 %v81
    %v135 = vpop.xlane.xlu0 %134
    %136 = vadd.xlane.f32.xlu0 %v82
    %v137 = vpop.xlane.xlu0 %136
    %138 = vadd.xlane.f32.xlu0 %v83
    %v139 = vpop.xlane.xlu0 %138
    %140 = vadd.xlane.f32.xlu0 %v84
    %v141 = vpop.xlane.xlu0 %140
    %142 = vadd.xlane.f32.xlu0 %v85
    %v143 = vpop.xlane.xlu0 %142
    %144 = vadd.xlane.f32.xlu0 %v86
    %v145 = vpop.xlane.xlu0 %144
    %146 = vadd.xlane.f32.xlu0 %v87
    %v147 = vpop.xlane.xlu0 %146
    %148 = vadd.xlane.f32.xlu0 %v88
    %v149 = vpop.xlane.xlu0 %148
    %150 = vadd.xlane.f32.xlu0 %v89
    %v151 = vpop.xlane.xlu0 %150
    %152 = vadd.xlane.f32.xlu0 %v90
    %v153 = vpop.xlane.xlu0 %152
    %154 = vadd.xlane.f32.xlu0 %v91
    %v155 = vpop.xlane.xlu0 %154
    %v156 = vrcp.pop 128.0
    %v157 = vmul.f32 %v93, %v156
    %v158 = vmul.f32 %v95, %v156
    %v159 = vmul.f32 %v97, %v156
    %v160 = vmul.f32 %v99, %v156
    %v161 = vmul.f32 %v101, %v156
    %v162 = vmul.f32 %v103, %v156
    %v163 = vmul.f32 %v105, %v156
    %v164 = vmul.f32 %v107, %v156
    %v165 = vmul.f32 %v109, %v156
    %v166 = vmul.f32 %v111, %v156
    %v167 = vmul.f32 %v113, %v156
    %v168 = vmul.f32 %v115, %v156
    %v169 = vmul.f32 %v117, %v156
    %v170 = vmul.f32 %v119, %v156
    %v171 = vmul.f32 %v121, %v156
    %v172 = vmul.f32 %v123, %v156
    %v173 = vmul.f32 %v125, %v156
    %v174 = vmul.f32 %v127, %v156
    %v175 = vmul.f32 %v129, %v156
    %v176 = vmul.f32 %v131, %v156
    %v177 = vmul.f32 %v133, %v156
    %v178 = vmul.f32 %v135, %v156
    %v179 = vmul.f32 %v137, %v156
    %v180 = vmul.f32 %v139, %v156
    %v181 = vmul.f32 %v141, %v156
    %v182 = vmul.f32 %v143, %v156
    %v183 = vmul.f32 %v145, %v156
    %v184 = vmul.f32 %v147, %v156
    %v185 = vmul.f32 %v149, %v156
    %v186 = vmul.f32 %v151, %v156
    %v187 = vmul.f32 %v153, %v156
    %v188 = vmul.f32 %v155, %v156
    %v189 = vsub.f32 %v60, %v157
    %v190 = vsub.f32 %v61, %v158
    %v191 = vsub.f32 %v62, %v159
    %v192 = vsub.f32 %v63, %v160
    %v193 = vsub.f32 %v64, %v161
    %v194 = vsub.f32 %v65, %v162
    %v195 = vsub.f32 %v66, %v163
    %v196 = vsub.f32 %v67, %v164
    %v197 = vsub.f32 %v68, %v165
    %v198 = vsub.f32 %v69, %v166
    %v199 = vsub.f32 %v70, %v167
    %v200 = vsub.f32 %v71, %v168
    %v201 = vsub.f32 %v72, %v169
    %v202 = vsub.f32 %v73, %v170
    %v203 = vsub.f32 %v74, %v171
    %v204 = vsub.f32 %v75, %v172
    %v205 = vsub.f32 %v76, %v173
    %v206 = vsub.f32 %v77, %v174
    %v207 = vsub.f32 %v78, %v175
    %v208 = vsub.f32 %v79, %v176
    %v209 = vsub.f32 %v80, %v177
    %v210 = vsub.f32 %v81, %v178
    %v211 = vsub.f32 %v82, %v179
    %v212 = vsub.f32 %v83, %v180
    %v213 = vsub.f32 %v84, %v181
    %v214 = vsub.f32 %v85, %v182
    %v215 = vsub.f32 %v86, %v183
    %v216 = vsub.f32 %v87, %v184
    %v217 = vsub.f32 %v88, %v185
    %v218 = vsub.f32 %v89, %v186
    %v219 = vsub.f32 %v90, %v187
    %v220 = vsub.f32 %v91, %v188
    %v221 = vmul.f32 %v189, %v189
    %v222 = vmul.f32 %v190, %v190
    %v223 = vmul.f32 %v191, %v191
    %v224 = vmul.f32 %v192, %v192
    %v225 = vmul.f32 %v193, %v193
    %v226 = vmul.f32 %v194, %v194
    %v227 = vmul.f32 %v195, %v195
    %v228 = vmul.f32 %v196, %v196
    %v229 = vmul.f32 %v197, %v197
    %v230 = vmul.f32 %v198, %v198
    %v231 = vmul.f32 %v199, %v199
    %v232 = vmul.f32 %v200, %v200
    %v233 = vmul.f32 %v201, %v201
    %v234 = vmul.f32 %v202, %v202
    %v235 = vmul.f32 %v203, %v203
    %v236 = vmul.f32 %v204, %v204
    %v237 = vmul.f32 %v205, %v205
    %v238 = vmul.f32 %v206, %v206
    %v239 = vmul.f32 %v207, %v207
    %v240 = vmul.f32 %v208, %v208
    %v241 = vmul.f32 %v209, %v209
    %v242 = vmul.f32 %v210, %v210
    %v243 = vmul.f32 %v211, %v211
    %v244 = vmul.f32 %v212, %v212
    %v245 = vmul.f32 %v213, %v213
    %v246 = vmul.f32 %v214, %v214
    %v247 = vmul.f32 %v215, %v215
    %v248 = vmul.f32 %v216, %v216
    %v249 = vmul.f32 %v217, %v217
    %v250 = vmul.f32 %v218, %v218
    %v251 = vmul.f32 %v219, %v219
    %v252 = vmul.f32 %v220, %v220
    %253 = vadd.xlane.f32.xlu0 %v221
    %v254 = vpop.xlane.xlu0 %253
    %255 = vadd.xlane.f32.xlu0 %v222
    %v256 = vpop.xlane.xlu0 %255
    %257 = vadd.xlane.f32.xlu0 %v223
    %v258 = vpop.xlane.xlu0 %257
    %259 = vadd.xlane.f32.xlu0 %v224
    %v260 = vpop.xlane.xlu0 %259
    %261 = vadd.xlane.f32.xlu0 %v225
    %v262 = vpop.xlane.xlu0 %261
    %263 = vadd.xlane.f32.xlu0 %v226
    %v264 = vpop.xlane.xlu0 %263
    %265 = vadd.xlane.f32.xlu0 %v227
    %v266 = vpop.xlane.xlu0 %265
    %267 = vadd.xlane.f32.xlu0 %v228
    %v268 = vpop.xlane.xlu0 %267
    %269 = vadd.xlane.f32.xlu0 %v229
    %v270 = vpop.xlane.xlu0 %269
    %271 = vadd.xlane.f32.xlu0 %v230
    %v272 = vpop.xlane.xlu0 %271
    %273 = vadd.xlane.f32.xlu0 %v231
    %v274 = vpop.xlane.xlu0 %273
    %275 = vadd.xlane.f32.xlu0 %v232
    %v276 = vpop.xlane.xlu0 %275
    %277 = vadd.xlane.f32.xlu0 %v233
    %v278 = vpop.xlane.xlu0 %277
    %279 = vadd.xlane.f32.xlu0 %v234
    %v280 = vpop.xlane.xlu0 %279
    %281 = vadd.xlane.f32.xlu0 %v235
    %v282 = vpop.xlane.xlu0 %281
    %283 = vadd.xlane.f32.xlu0 %v236
    %v284 = vpop.xlane.xlu0 %283
    %285 = vadd.xlane.f32.xlu0 %v237
    %v286 = vpop.xlane.xlu0 %285
    %287 = vadd.xlane.f32.xlu0 %v238
    %v288 = vpop.xlane.xlu0 %287
    %289 = vadd.xlane.f32.xlu0 %v239
    %v290 = vpop.xlane.xlu0 %289
    %291 = vadd.xlane.f32.xlu0 %v240
    %v292 = vpop.xlane.xlu0 %291
    %293 = vadd.xlane.f32.xlu0 %v241
    %v294 = vpop.xlane.xlu0 %293
    %295 = vadd.xlane.f32.xlu0 %v242
    %v296 = vpop.xlane.xlu0 %295
    %297 = vadd.xlane.f32.xlu0 %v243
    %v298 = vpop.xlane.xlu0 %297
    %299 = vadd.xlane.f32.xlu0 %v244
    %v300 = vpop.xlane.xlu0 %299
    %301 = vadd.xlane.f32.xlu0 %v245
    %v302 = vpop.xlane.xlu0 %301
    %303 = vadd.xlane.f32.xlu0 %v246
    %v304 = vpop.xlane.xlu0 %303
    %305 = vadd.xlane.f32.xlu0 %v247
    %v306 = vpop.xlane.xlu0 %305
    %307 = vadd.xlane.f32.xlu0 %v248
    %v308 = vpop.xlane.xlu0 %307
    %309 = vadd.xlane.f32.xlu0 %v249
    %v310 = vpop.xlane.xlu0 %309
    %311 = vadd.xlane.f32.xlu0 %v250
    %v312 = vpop.xlane.xlu0 %311
    %313 = vadd.xlane.f32.xlu0 %v251
    %v314 = vpop.xlane.xlu0 %313
    %315 = vadd.xlane.f32.xlu0 %v252
    %v316 = vpop.xlane.xlu0 %315
    %v317 = vmul.f32 %v254, %v156
    %v318 = vmul.f32 %v256, %v156
    %v319 = vmul.f32 %v258, %v156
    %v320 = vmul.f32 %v260, %v156
    %v321 = vmul.f32 %v262, %v156
    %v322 = vmul.f32 %v264, %v156
    %v323 = vmul.f32 %v266, %v156
    %v324 = vmul.f32 %v268, %v156
    %v325 = vmul.f32 %v270, %v156
    %v326 = vmul.f32 %v272, %v156
    %v327 = vmul.f32 %v274, %v156
    %v328 = vmul.f32 %v276, %v156
    %v329 = vmul.f32 %v278, %v156
    %v330 = vmul.f32 %v280, %v156
    %v331 = vmul.f32 %v282, %v156
    %v332 = vmul.f32 %v284, %v156
    %v333 = vmul.f32 %v286, %v156
    %v334 = vmul.f32 %v288, %v156
    %v335 = vmul.f32 %v290, %v156
    %v336 = vmul.f32 %v292, %v156
    %v337 = vmul.f32 %v294, %v156
    %v338 = vmul.f32 %v296, %v156
    %v339 = vmul.f32 %v298, %v156
    %v340 = vmul.f32 %v300, %v156
    %v341 = vmul.f32 %v302, %v156
    %v342 = vmul.f32 %v304, %v156
    %v343 = vmul.f32 %v306, %v156
    %v344 = vmul.f32 %v308, %v156
    %v345 = vmul.f32 %v310, %v156
    %v346 = vmul.f32 %v312, %v156
    %v347 = vmul.f32 %v314, %v156
    %v348 = vmul.f32 %v316, %v156
    %v349 = vadd.f32 %v317, 1e-06
    %v350 = vadd.f32 %v318, 1e-06
    %v351 = vadd.f32 %v319, 1e-06
    %v352 = vadd.f32 %v320, 1e-06
    %v353 = vadd.f32 %v321, 1e-06
    %v354 = vadd.f32 %v322, 1e-06
    %v355 = vadd.f32 %v323, 1e-06
    %v356 = vadd.f32 %v324, 1e-06
    %v357 = vadd.f32 %v325, 1e-06
    %v358 = vadd.f32 %v326, 1e-06
    %v359 = vadd.f32 %v327, 1e-06
    %v360 = vadd.f32 %v328, 1e-06
    %v361 = vadd.f32 %v329, 1e-06
    %v362 = vadd.f32 %v330, 1e-06
    %v363 = vadd.f32 %v331, 1e-06
    %v364 = vadd.f32 %v332, 1e-06
    %v365 = vadd.f32 %v333, 1e-06
    %v366 = vadd.f32 %v334, 1e-06
    %v367 = vadd.f32 %v335, 1e-06
    %v368 = vadd.f32 %v336, 1e-06
    %v369 = vadd.f32 %v337, 1e-06
    %v370 = vadd.f32 %v338, 1e-06
    %v371 = vadd.f32 %v339, 1e-06
    %v372 = vadd.f32 %v340, 1e-06
    %v373 = vadd.f32 %v341, 1e-06
    %v374 = vadd.f32 %v342, 1e-06
    %v375 = vadd.f32 %v343, 1e-06
    %v376 = vadd.f32 %v344, 1e-06
    %v377 = vadd.f32 %v345, 1e-06
    %v378 = vadd.f32 %v346, 1e-06
    %v379 = vadd.f32 %v347, 1e-06
    %v380 = vadd.f32 %v348, 1e-06
    %v381 = vrsqrt.pop %v349
    %v382 = vrsqrt.pop %v350
    %v383 = vrsqrt.pop %v351
    %v384 = vrsqrt.pop %v352
    %v385 = vrsqrt.pop %v353
    %v386 = vrsqrt.pop %v354
    %v387 = vrsqrt.pop %v355
    %v388 = vrsqrt.pop %v356
    %v389 = vrsqrt.pop %v357
    %v390 = vrsqrt.pop %v358
    %v391 = vrsqrt.pop %v359
    %v392 = vrsqrt.pop %v360
    %v393 = vrsqrt.pop %v361
    %v394 = vrsqrt.pop %v362
    %v395 = vrsqrt.pop %v363
    %v396 = vrsqrt.pop %v364
    %v397 = vrsqrt.pop %v365
    %v398 = vrsqrt.pop %v366
    %v399 = vrsqrt.pop %v367
    %v400 = vrsqrt.pop %v368
    %v401 = vrsqrt.pop %v369
    %v402 = vrsqrt.pop %v370
    %v403 = vrsqrt.pop %v371
    %v404 = vrsqrt.pop %v372
    %v405 = vrsqrt.pop %v373
    %v406 = vrsqrt.pop %v374
    %v407 = vrsqrt.pop %v375
    %v408 = vrsqrt.pop %v376
    %v409 = vrsqrt.pop %v377
    %v410 = vrsqrt.pop %v378
    %v411 = vrsqrt.pop %v379
    %v412 = vrsqrt.pop %v380
    %v413 = vmul.f32 %v189, %v381
    %v414 = vmul.f32 %v190, %v382
    %v415 = vmul.f32 %v191, %v383
    %v416 = vmul.f32 %v192, %v384
    %v417 = vmul.f32 %v193, %v385
    %v418 = vmul.f32 %v194, %v386
    %v419 = vmul.f32 %v195, %v387
    %v420 = vmul.f32 %v196, %v388
    %v421 = vmul.f32 %v197, %v389
    %v422 = vmul.f32 %v198, %v390
    %v423 = vmul.f32 %v199, %v391
    %v424 = vmul.f32 %v200, %v392
    %v425 = vmul.f32 %v201, %v393
    %v426 = vmul.f32 %v202, %v394
    %v427 = vmul.f32 %v203, %v395
    %v428 = vmul.f32 %v204, %v396
    %v429 = vmul.f32 %v205, %v397
    %v430 = vmul.f32 %v206, %v398
    %v431 = vmul.f32 %v207, %v399
    %v432 = vmul.f32 %v208, %v400
    %v433 = vmul.f32 %v209, %v401
    %v434 = vmul.f32 %v210, %v402
    %v435 = vmul.f32 %v211, %v403
    %v436 = vmul.f32 %v212, %v404
    %v437 = vmul.f32 %v213, %v405
    %v438 = vmul.f32 %v214, %v406
    %v439 = vmul.f32 %v215, %v407
    %v440 = vmul.f32 %v216, %v408
    %v441 = vmul.f32 %v217, %v409
    %v442 = vmul.f32 %v218, %v410
    %v443 = vmul.f32 %v219, %v411
    %v444 = vmul.f32 %v220, %v412
    %v445 = vpack.c.bf16 %v414, %v413
    %v446 = vpack.c.bf16 %v416, %v415
    %v447 = vpack.c.bf16 %v418, %v417
    %v448 = vpack.c.bf16 %v420, %v419
    %v449 = vpack.c.bf16 %v422, %v421
    %v450 = vpack.c.bf16 %v424, %v423
    %v451 = vpack.c.bf16 %v426, %v425
    %v452 = vpack.c.bf16 %v428, %v427
    %v453 = vpack.c.bf16 %v430, %v429
    %v454 = vpack.c.bf16 %v432, %v431
    %v455 = vpack.c.bf16 %v434, %v433
    %v456 = vpack.c.bf16 %v436, %v435
    %v457 = vpack.c.bf16 %v438, %v437
    %v458 = vpack.c.bf16 %v440, %v439
    %v459 = vpack.c.bf16 %v442, %v441
    %v460 = vpack.c.bf16 %v444, %v443
    %v461 = vld [vmem:[#allocation5] sm:$0xff]
    %v462 = vld [vmem:[#allocation5 + $0x8] sm:$0xff]
    %v463 = vld [vmem:[#allocation5 + $0x10] sm:$0xff]
    %v464 = vld [vmem:[#allocation5 + $0x18] sm:$0xff]
    %v465 = vld [vmem:[#allocation5 + $0x20] sm:$0xff]
    %v466 = vld [vmem:[#allocation5 + $0x28] sm:$0xff]
    %v467 = vld [vmem:[#allocation5 + $0x30] sm:$0xff]
    %v468 = vld [vmem:[#allocation5 + $0x38] sm:$0xff]
    %v469 = vld [vmem:[#allocation5 + $0x40] sm:$0xff]
    %v470 = vld [vmem:[#allocation5 + $0x48] sm:$0xff]
    %v471 = vld [vmem:[#allocation5 + $0x50] sm:$0xff]
    %v472 = vld [vmem:[#allocation5 + $0x58] sm:$0xff]
    %v473 = vld [vmem:[#allocation5 + $0x60] sm:$0xff]
    %v474 = vld [vmem:[#allocation5 + $0x68] sm:$0xff]
    %v475 = vld [vmem:[#allocation5 + $0x70] sm:$0xff]
    %v476 = vld [vmem:[#allocation5 + $0x78] sm:$0xff]
    %v477 = vld [vmem:[#allocation5 + $0x80] sm:$0xff]
    %v478 = vld [vmem:[#allocation5 + $0x88] sm:$0xff]
    %v479 = vld [vmem:[#allocation5 + $0x90] sm:$0xff]
    %v480 = vld [vmem:[#allocation5 + $0x98] sm:$0xff]
    %v481 = vld [vmem:[#allocation5 + $0xa0] sm:$0xff]
    %v482 = vld [vmem:[#allocation5 + $0xa8] sm:$0xff]
    %v483 = vld [vmem:[#allocation5 + $0xb0] sm:$0xff]
    %v484 = vld [vmem:[#allocation5 + $0xb8] sm:$0xff]
    %v485 = vld [vmem:[#allocation5 + $0xc0] sm:$0xff]
    %v486 = vld [vmem:[#allocation5 + $0xc8] sm:$0xff]
    %v487 = vld [vmem:[#allocation5 + $0xd0] sm:$0xff]
    %v488 = vld [vmem:[#allocation5 + $0xd8] sm:$0xff]
    %v489 = vld [vmem:[#allocation5 + $0xe0] sm:$0xff]
    %v490 = vld [vmem:[#allocation5 + $0xe8] sm:$0xff]
    %v491 = vld [vmem:[#allocation5 + $0xf0] sm:$0xff]
    %v492 = vld [vmem:[#allocation5 + $0xf8] sm:$0xff]
    %493 = vadd.xlane.f32.xlu0 %v461
    %v494 = vpop.xlane.xlu0 %493
    %495 = vadd.xlane.f32.xlu0 %v462
    %v496 = vpop.xlane.xlu0 %495
    %497 = vadd.xlane.f32.xlu0 %v463
    %v498 = vpop.xlane.xlu0 %497
    %499 = vadd.xlane.f32.xlu0 %v464
    %v500 = vpop.xlane.xlu0 %499
    %501 = vadd.xlane.f32.xlu0 %v465
    %v502 = vpop.xlane.xlu0 %501
    %503 = vadd.xlane.f32.xlu0 %v466
    %v504 = vpop.xlane.xlu0 %503
    %505 = vadd.xlane.f32.xlu0 %v467
    %v506 = vpop.xlane.xlu0 %505
    %507 = vadd.xlane.f32.xlu0 %v468
    %v508 = vpop.xlane.xlu0 %507
    %509 = vadd.xlane.f32.xlu0 %v469
    %v510 = vpop.xlane.xlu0 %509
    %511 = vadd.xlane.f32.xlu0 %v470
    %v512 = vpop.xlane.xlu0 %511
    %513 = vadd.xlane.f32.xlu0 %v471
    %v514 = vpop.xlane.xlu0 %513
    %515 = vadd.xlane.f32.xlu0 %v472
    %v516 = vpop.xlane.xlu0 %515
    %517 = vadd.xlane.f32.xlu0 %v473
    %v518 = vpop.xlane.xlu0 %517
    %519 = vadd.xlane.f32.xlu0 %v474
    %v520 = vpop.xlane.xlu0 %519
    %521 = vadd.xlane.f32.xlu0 %v475
    %v522 = vpop.xlane.xlu0 %521
    %523 = vadd.xlane.f32.xlu0 %v476
    %v524 = vpop.xlane.xlu0 %523
    %525 = vadd.xlane.f32.xlu0 %v477
    %v526 = vpop.xlane.xlu0 %525
    %527 = vadd.xlane.f32.xlu0 %v478
    %v528 = vpop.xlane.xlu0 %527
    %529 = vadd.xlane.f32.xlu0 %v479
    %v530 = vpop.xlane.xlu0 %529
    %531 = vadd.xlane.f32.xlu0 %v480
    %v532 = vpop.xlane.xlu0 %531
    %533 = vadd.xlane.f32.xlu0 %v481
    %v534 = vpop.xlane.xlu0 %533
    %535 = vadd.xlane.f32.xlu0 %v482
    %v536 = vpop.xlane.xlu0 %535
    %537 = vadd.xlane.f32.xlu0 %v483
    %v538 = vpop.xlane.xlu0 %537
    %539 = vadd.xlane.f32.xlu0 %v484
    %v540 = vpop.xlane.xlu0 %539
    %541 = vadd.xlane.f32.xlu0 %v485
    %v542 = vpop.xlane.xlu0 %541
    %543 = vadd.xlane.f32.xlu0 %v486
    %v544 = vpop.xlane.xlu0 %543
    %545 = vadd.xlane.f32.xlu0 %v487
    %v546 = vpop.xlane.xlu0 %545
    %547 = vadd.xlane.f32.xlu0 %v488
    %v548 = vpop.xlane.xlu0 %547
    %549 = vadd.xlane.f32.xlu0 %v489
    %v550 = vpop.xlane.xlu0 %549
    %551 = vadd.xlane.f32.xlu0 %v490
    %v552 = vpop.xlane.xlu0 %551
    %553 = vadd.xlane.f32.xlu0 %v491
    %v554 = vpop.xlane.xlu0 %553
    %555 = vadd.xlane.f32.xlu0 %v492
    %v556 = vpop.xlane.xlu0 %555
    %v557 = vmul.f32 %v494, %v156
    %v558 = vmul.f32 %v496, %v156
    %v559 = vmul.f32 %v498, %v156
    %v560 = vmul.f32 %v500, %v156
    %v561 = vmul.f32 %v502, %v156
    %v562 = vmul.f32 %v504, %v156
    %v563 = vmul.f32 %v506, %v156
    %v564 = vmul.f32 %v508, %v156
    %v565 = vmul.f32 %v510, %v156
    %v566 = vmul.f32 %v512, %v156
    %v567 = vmul.f32 %v514, %v156
    %v568 = vmul.f32 %v516, %v156
    %v569 = vmul.f32 %v518, %v156
    %v570 = vmul.f32 %v520, %v156
    %v571 = vmul.f32 %v522, %v156
    %v572 = vmul.f32 %v524, %v156
    %v573 = vmul.f32 %v526, %v156
    %v574 = vmul.f32 %v528, %v156
    %v575 = vmul.f32 %v530, %v156
    %v576 = vmul.f32 %v532, %v156
    %v577 = vmul.f32 %v534, %v156
    %v578 = vmul.f32 %v536, %v156
    %v579 = vmul.f32 %v538, %v156
    %v580 = vmul.f32 %v540, %v156
    %v581 = vmul.f32 %v542, %v156
    %v582 = vmul.f32 %v544, %v156
    %v583 = vmul.f32 %v546, %v156
    %v584 = vmul.f32 %v548, %v156
    %v585 = vmul.f32 %v550, %v156
    %v586 = vmul.f32 %v552, %v156
    %v587 = vmul.f32 %v554, %v156
    %v588 = vmul.f32 %v556, %v156
    %v589 = vsub.f32 %v461, %v557
    %v590 = vsub.f32 %v462, %v558
    %v591 = vsub.f32 %v463, %v559
    %v592 = vsub.f32 %v464, %v560
    %v593 = vsub.f32 %v465, %v561
    %v594 = vsub.f32 %v466, %v562
    %v595 = vsub.f32 %v467, %v563
    %v596 = vsub.f32 %v468, %v564
    %v597 = vsub.f32 %v469, %v565
    %v598 = vsub.f32 %v470, %v566
    %v599 = vsub.f32 %v471, %v567
    %v600 = vsub.f32 %v472, %v568
    %v601 = vsub.f32 %v473, %v569
    %v602 = vsub.f32 %v474, %v570
    %v603 = vsub.f32 %v475, %v571
    %v604 = vsub.f32 %v476, %v572
    %v605 = vsub.f32 %v477, %v573
    %v606 = vsub.f32 %v478, %v574
    %v607 = vsub.f32 %v479, %v575
    %v608 = vsub.f32 %v480, %v576
    %v609 = vsub.f32 %v481, %v577
    %v610 = vsub.f32 %v482, %v578
    %v611 = vsub.f32 %v483, %v579
    %v612 = vsub.f32 %v484, %v580
    %v613 = vsub.f32 %v485, %v581
    %v614 = vsub.f32 %v486, %v582
    %v615 = vsub.f32 %v487, %v583
    %v616 = vsub.f32 %v488, %v584
    %v617 = vsub.f32 %v489, %v585
    %v618 = vsub.f32 %v490, %v586
    %v619 = vsub.f32 %v491, %v587
    %v620 = vsub.f32 %v492, %v588
    %v621 = vmul.f32 %v589, %v589
    %v622 = vmul.f32 %v590, %v590
    %v623 = vmul.f32 %v591, %v591
    %v624 = vmul.f32 %v592, %v592
    %v625 = vmul.f32 %v593, %v593
    %v626 = vmul.f32 %v594, %v594
    %v627 = vmul.f32 %v595, %v595
    %v628 = vmul.f32 %v596, %v596
    %v629 = vmul.f32 %v597, %v597
    %v630 = vmul.f32 %v598, %v598
    %v631 = vmul.f32 %v599, %v599
    %v632 = vmul.f32 %v600, %v600
    %v633 = vmul.f32 %v601, %v601
    %v634 = vmul.f32 %v602, %v602
    %v635 = vmul.f32 %v603, %v603
    %v636 = vmul.f32 %v604, %v604
    %v637 = vmul.f32 %v605, %v605
    %v638 = vmul.f32 %v606, %v606
    %v639 = vmul.f32 %v607, %v607
    %v640 = vmul.f32 %v608, %v608
    %v641 = vmul.f32 %v609, %v609
    %v642 = vmul.f32 %v610, %v610
    %v643 = vmul.f32 %v611, %v611
    %v644 = vmul.f32 %v612, %v612
    %v645 = vmul.f32 %v613, %v613
    %v646 = vmul.f32 %v614, %v614
    %v647 = vmul.f32 %v615, %v615
    %v648 = vmul.f32 %v616, %v616
    %v649 = vmul.f32 %v617, %v617
    %v650 = vmul.f32 %v618, %v618
    %v651 = vmul.f32 %v619, %v619
    %v652 = vmul.f32 %v620, %v620
    %653 = vadd.xlane.f32.xlu0 %v621
    %v654 = vpop.xlane.xlu0 %653
    %655 = vadd.xlane.f32.xlu0 %v622
    %v656 = vpop.xlane.xlu0 %655
    %657 = vadd.xlane.f32.xlu0 %v623
    %v658 = vpop.xlane.xlu0 %657
    %659 = vadd.xlane.f32.xlu0 %v624
    %v660 = vpop.xlane.xlu0 %659
    %661 = vadd.xlane.f32.xlu0 %v625
    %v662 = vpop.xlane.xlu0 %661
    %663 = vadd.xlane.f32.xlu0 %v626
    %v664 = vpop.xlane.xlu0 %663
    %665 = vadd.xlane.f32.xlu0 %v627
    %v666 = vpop.xlane.xlu0 %665
    %667 = vadd.xlane.f32.xlu0 %v628
    %v668 = vpop.xlane.xlu0 %667
    %669 = vadd.xlane.f32.xlu0 %v629
    %v670 = vpop.xlane.xlu0 %669
    %671 = vadd.xlane.f32.xlu0 %v630
    %v672 = vpop.xlane.xlu0 %671
    %673 = vadd.xlane.f32.xlu0 %v631
    %v674 = vpop.xlane.xlu0 %673
    %675 = vadd.xlane.f32.xlu0 %v632
    %v676 = vpop.xlane.xlu0 %675
    %677 = vadd.xlane.f32.xlu0 %v633
    %v678 = vpop.xlane.xlu0 %677
    %679 = vadd.xlane.f32.xlu0 %v634
    %v680 = vpop.xlane.xlu0 %679
    %681 = vadd.xlane.f32.xlu0 %v635
    %v682 = vpop.xlane.xlu0 %681
    %683 = vadd.xlane.f32.xlu0 %v636
    %v684 = vpop.xlane.xlu0 %683
    %685 = vadd.xlane.f32.xlu0 %v637
    %v686 = vpop.xlane.xlu0 %685
    %687 = vadd.xlane.f32.xlu0 %v638
    %v688 = vpop.xlane.xlu0 %687
    %689 = vadd.xlane.f32.xlu0 %v639
    %v690 = vpop.xlane.xlu0 %689
    %691 = vadd.xlane.f32.xlu0 %v640
    %v692 = vpop.xlane.xlu0 %691
    %693 = vadd.xlane.f32.xlu0 %v641
    %v694 = vpop.xlane.xlu0 %693
    %695 = vadd.xlane.f32.xlu0 %v642
    %v696 = vpop.xlane.xlu0 %695
    %697 = vadd.xlane.f32.xlu0 %v643
    %v698 = vpop.xlane.xlu0 %697
    %699 = vadd.xlane.f32.xlu0 %v644
    %v700 = vpop.xlane.xlu0 %699
    %701 = vadd.xlane.f32.xlu0 %v645
    %v702 = vpop.xlane.xlu0 %701
    %703 = vadd.xlane.f32.xlu0 %v646
    %v704 = vpop.xlane.xlu0 %703
    %705 = vadd.xlane.f32.xlu0 %v647
    %v706 = vpop.xlane.xlu0 %705
    %707 = vadd.xlane.f32.xlu0 %v648
    %v708 = vpop.xlane.xlu0 %707
    %709 = vadd.xlane.f32.xlu0 %v649
    %v710 = vpop.xlane.xlu0 %709
    %711 = vadd.xlane.f32.xlu0 %v650
    %v712 = vpop.xlane.xlu0 %711
    %713 = vadd.xlane.f32.xlu0 %v651
    %v714 = vpop.xlane.xlu0 %713
    %715 = vadd.xlane.f32.xlu0 %v652
    %v716 = vpop.xlane.xlu0 %715
    %v717 = vmul.f32 %v654, %v156
    %v718 = vmul.f32 %v656, %v156
    %v719 = vmul.f32 %v658, %v156
    %v720 = vmul.f32 %v660, %v156
    %v721 = vmul.f32 %v662, %v156
    %v722 = vmul.f32 %v664, %v156
    %v723 = vmul.f32 %v666, %v156
    %v724 = vmul.f32 %v668, %v156
    %v725 = vmul.f32 %v670, %v156
    %v726 = vmul.f32 %v672, %v156
    %v727 = vmul.f32 %v674, %v156
    %v728 = vmul.f32 %v676, %v156
    %v729 = vmul.f32 %v678, %v156
    %v730 = vmul.f32 %v680, %v156
    %v731 = vmul.f32 %v682, %v156
    %v732 = vmul.f32 %v684, %v156
    %v733 = vmul.f32 %v686, %v156
    %v734 = vmul.f32 %v688, %v156
    %v735 = vmul.f32 %v690, %v156
    %v736 = vmul.f32 %v692, %v156
    %v737 = vmul.f32 %v694, %v156
    %v738 = vmul.f32 %v696, %v156
    %v739 = vmul.f32 %v698, %v156
    %v740 = vmul.f32 %v700, %v156
    %v741 = vmul.f32 %v702, %v156
    %v742 = vmul.f32 %v704, %v156
    %v743 = vmul.f32 %v706, %v156
    %v744 = vmul.f32 %v708, %v156
    %v745 = vmul.f32 %v710, %v156
    %v746 = vmul.f32 %v712, %v156
    %v747 = vmul.f32 %v714, %v156
    %v748 = vmul.f32 %v716, %v156
    %v749 = vadd.f32 %v717, 1e-06
    %v750 = vadd.f32 %v718, 1e-06
    %v751 = vadd.f32 %v719, 1e-06
    %v752 = vadd.f32 %v720, 1e-06
    %v753 = vadd.f32 %v721, 1e-06
    %v754 = vadd.f32 %v722, 1e-06
    %v755 = vadd.f32 %v723, 1e-06
    %v756 = vadd.f32 %v724, 1e-06
    %v757 = vadd.f32 %v725, 1e-06
    %v758 = vadd.f32 %v726, 1e-06
    %v759 = vadd.f32 %v727, 1e-06
    %v760 = vadd.f32 %v728, 1e-06
    %v761 = vadd.f32 %v729, 1e-06
    %v762 = vadd.f32 %v730, 1e-06
    %v763 = vadd.f32 %v731, 1e-06
    %v764 = vadd.f32 %v732, 1e-06
    %v765 = vadd.f32 %v733, 1e-06
    %v766 = vadd.f32 %v734, 1e-06
    %v767 = vadd.f32 %v735, 1e-06
    %v768 = vadd.f32 %v736, 1e-06
    %v769 = vadd.f32 %v737, 1e-06
    %v770 = vadd.f32 %v738, 1e-06
    %v771 = vadd.f32 %v739, 1e-06
    %v772 = vadd.f32 %v740, 1e-06
    %v773 = vadd.f32 %v741, 1e-06
    %v774 = vadd.f32 %v742, 1e-06
    %v775 = vadd.f32 %v743, 1e-06
    %v776 = vadd.f32 %v744, 1e-06
    %v777 = vadd.f32 %v745, 1e-06
    %v778 = vadd.f32 %v746, 1e-06
    %v779 = vadd.f32 %v747, 1e-06
    %v780 = vadd.f32 %v748, 1e-06
    %v781 = vrsqrt.pop %v749
    %v782 = vrsqrt.pop %v750
    %v783 = vrsqrt.pop %v751
    %v784 = vrsqrt.pop %v752
    %v785 = vrsqrt.pop %v753
    %v786 = vrsqrt.pop %v754
    %v787 = vrsqrt.pop %v755
    %v788 = vrsqrt.pop %v756
    %v789 = vrsqrt.pop %v757
    %v790 = vrsqrt.pop %v758
    %v791 = vrsqrt.pop %v759
    %v792 = vrsqrt.pop %v760
    %v793 = vrsqrt.pop %v761
    %v794 = vrsqrt.pop %v762
    %v795 = vrsqrt.pop %v763
    %v796 = vrsqrt.pop %v764
    %v797 = vrsqrt.pop %v765
    %v798 = vrsqrt.pop %v766
    %v799 = vrsqrt.pop %v767
    %v800 = vrsqrt.pop %v768
    %v801 = vrsqrt.pop %v769
    %v802 = vrsqrt.pop %v770
    %v803 = vrsqrt.pop %v771
    %v804 = vrsqrt.pop %v772
    %v805 = vrsqrt.pop %v773
    %v806 = vrsqrt.pop %v774
    %v807 = vrsqrt.pop %v775
    %v808 = vrsqrt.pop %v776
    %v809 = vrsqrt.pop %v777
    %v810 = vrsqrt.pop %v778
    %v811 = vrsqrt.pop %v779
    %v812 = vrsqrt.pop %v780
    %v813 = vmul.f32 %v589, %v781
    %v814 = vmul.f32 %v590, %v782
    %v815 = vmul.f32 %v591, %v783
    %v816 = vmul.f32 %v592, %v784
    %v817 = vmul.f32 %v593, %v785
    %v818 = vmul.f32 %v594, %v786
    %v819 = vmul.f32 %v595, %v787
    %v820 = vmul.f32 %v596, %v788
    %v821 = vmul.f32 %v597, %v789
    %v822 = vmul.f32 %v598, %v790
    %v823 = vmul.f32 %v599, %v791
    %v824 = vmul.f32 %v600, %v792
    %v825 = vmul.f32 %v601, %v793
    %v826 = vmul.f32 %v602, %v794
    %v827 = vmul.f32 %v603, %v795
    %v828 = vmul.f32 %v604, %v796
    %v829 = vmul.f32 %v605, %v797
    %v830 = vmul.f32 %v606, %v798
    %v831 = vmul.f32 %v607, %v799
    %v832 = vmul.f32 %v608, %v800
    %v833 = vmul.f32 %v609, %v801
    %v834 = vmul.f32 %v610, %v802
    %v835 = vmul.f32 %v611, %v803
    %v836 = vmul.f32 %v612, %v804
    %v837 = vmul.f32 %v613, %v805
    %v838 = vmul.f32 %v614, %v806
    %v839 = vmul.f32 %v615, %v807
    %v840 = vmul.f32 %v616, %v808
    %v841 = vmul.f32 %v617, %v809
    %v842 = vmul.f32 %v618, %v810
    %v843 = vmul.f32 %v619, %v811
    %v844 = vmul.f32 %v620, %v812
    %v845 = vpack.c.bf16 %v814, %v813
    %v846 = vpack.c.bf16 %v816, %v815
    %v847 = vpack.c.bf16 %v818, %v817
    %v848 = vpack.c.bf16 %v820, %v819
    %v849 = vpack.c.bf16 %v822, %v821
    %v850 = vpack.c.bf16 %v824, %v823
    %v851 = vpack.c.bf16 %v826, %v825
    %v852 = vpack.c.bf16 %v828, %v827
    %v853 = vpack.c.bf16 %v830, %v829
    %v854 = vpack.c.bf16 %v832, %v831
    %v855 = vpack.c.bf16 %v834, %v833
    %v856 = vpack.c.bf16 %v836, %v835
    %v857 = vpack.c.bf16 %v838, %v837
    %v858 = vpack.c.bf16 %v840, %v839
    %v859 = vpack.c.bf16 %v842, %v841
    %v860 = vpack.c.bf16 %v844, %v843
    %v861 = vld [vmem:[#allocation7] sm:$0xf]
    %v862 = vld [vmem:[#allocation7 + $0x4] sm:$0xf]
    %v863 = vld [vmem:[#allocation7 + $0x8] sm:$0xf]
    %v864 = vld [vmem:[#allocation7 + $0xc] sm:$0xf]
    %v865 = vld [vmem:[#allocation7 + $0x10] sm:$0xf]
    %v866 = vld [vmem:[#allocation7 + $0x14] sm:$0xf]
    %v867 = vld [vmem:[#allocation7 + $0x18] sm:$0xf]
    %v868 = vld [vmem:[#allocation7 + $0x1c] sm:$0xf]
    %v869 = vld [vmem:[#allocation7 + $0x20] sm:$0xf]
    %v870 = vld [vmem:[#allocation7 + $0x24] sm:$0xf]
    %v871 = vld [vmem:[#allocation7 + $0x28] sm:$0xf]
    %v872 = vld [vmem:[#allocation7 + $0x2c] sm:$0xf]
    %v873 = vld [vmem:[#allocation7 + $0x30] sm:$0xf]
    %v874 = vld [vmem:[#allocation7 + $0x34] sm:$0xf]
    %v875 = vld [vmem:[#allocation7 + $0x38] sm:$0xf]
    %v876 = vld [vmem:[#allocation7 + $0x3c] sm:$0xf]
    %v877 = vld [vmem:[#allocation7 + $0x40] sm:$0xf]
    %v878 = vld [vmem:[#allocation7 + $0x44] sm:$0xf]
    %v879 = vld [vmem:[#allocation7 + $0x48] sm:$0xf]
    %v880 = vld [vmem:[#allocation7 + $0x4c] sm:$0xf]
    %v881 = vld [vmem:[#allocation7 + $0x50] sm:$0xf]
    %v882 = vld [vmem:[#allocation7 + $0x54] sm:$0xf]
    %v883 = vld [vmem:[#allocation7 + $0x58] sm:$0xf]
    %v884 = vld [vmem:[#allocation7 + $0x5c] sm:$0xf]
    %v885 = vld [vmem:[#allocation7 + $0x60] sm:$0xf]
    %v886 = vld [vmem:[#allocation7 + $0x64] sm:$0xf]
    %v887 = vld [vmem:[#allocation7 + $0x68] sm:$0xf]
    %v888 = vld [vmem:[#allocation7 + $0x6c] sm:$0xf]
    %v889 = vld [vmem:[#allocation7 + $0x70] sm:$0xf]
    %v890 = vld [vmem:[#allocation7 + $0x74] sm:$0xf]
    %v891 = vld [vmem:[#allocation7 + $0x78] sm:$0xf]
    %v892 = vld [vmem:[#allocation7 + $0x7c] sm:$0xf]
    %v893 = vld [vmem:[%s2] sm:$0x1]
    %v895 = vlaneseq
    %v896 = vshrl.u32 %v895, 7
    %v897 = vsub.s32 0, %v896
    %v898 = vrot.slane %v893, %v897
    %v932 = vunpack.c.l.b16 %v861
    %v933 = vunpack.c.l.b16 %v862
    %v934 = vunpack.c.l.b16 %v863
    %v935 = vunpack.c.l.b16 %v864
    %v936 = vunpack.c.l.b16 %v865
    %v937 = vunpack.c.l.b16 %v866
    %v938 = vunpack.c.l.b16 %v867
    %v939 = vunpack.c.l.b16 %v868
    %v940 = vunpack.c.l.b16 %v869
    %v941 = vunpack.c.l.b16 %v870
    %v942 = vunpack.c.l.b16 %v871
    %v943 = vunpack.c.l.b16 %v872
    %v944 = vunpack.c.l.b16 %v873
    %v945 = vunpack.c.l.b16 %v874
    %v946 = vunpack.c.l.b16 %v875
    %v947 = vunpack.c.l.b16 %v876
    %v948 = vunpack.c.l.b16 %v877
    %v949 = vunpack.c.l.b16 %v878
    %v950 = vunpack.c.l.b16 %v879
    %v951 = vunpack.c.l.b16 %v880
    %v952 = vunpack.c.l.b16 %v881
    %v953 = vunpack.c.l.b16 %v882
    %v954 = vunpack.c.l.b16 %v883
    %v955 = vunpack.c.l.b16 %v884
    %v956 = vunpack.c.l.b16 %v885
    %v957 = vunpack.c.l.b16 %v886
    %v958 = vunpack.c.l.b16 %v887
    %v959 = vunpack.c.l.b16 %v888
    %v960 = vunpack.c.l.b16 %v889
    %v961 = vunpack.c.l.b16 %v890
    %v962 = vunpack.c.l.b16 %v891
    %v963 = vunpack.c.l.b16 %v892
    %v964 = vpack.c.b16 %v933, %v932
    %v965 = vpack.c.b16 %v935, %v934
    %v966 = vpack.c.b16 %v937, %v936
    %v967 = vpack.c.b16 %v939, %v938
    %v968 = vpack.c.b16 %v941, %v940
    %v969 = vpack.c.b16 %v943, %v942
    %v970 = vpack.c.b16 %v945, %v944
    %v971 = vpack.c.b16 %v947, %v946
    %v972 = vpack.c.b16 %v949, %v948
    %v973 = vpack.c.b16 %v951, %v950
    %v974 = vpack.c.b16 %v953, %v952
    %v975 = vpack.c.b16 %v955, %v954
    %v976 = vpack.c.b16 %v957, %v956
    %v977 = vpack.c.b16 %v959, %v958
    %v978 = vpack.c.b16 %v961, %v960
    %v979 = vpack.c.b16 %v963, %v962
    %996 = vmatprep.subr.bf16.mxu0 0
    %997 = vmatpush1.bf16.msra.mxu0 %v964
    %998 = vmatprep.subr.bf16.mxu0 0
    %999 = vmatpush1.bf16.msra.mxu0 %v965
    %1000 = vmatprep.subr.bf16.mxu0 0
    %1001 = vmatpush1.bf16.msra.mxu0 %v966
    %1002 = vmatprep.subr.bf16.mxu0 0
    %1003 = vmatpush1.bf16.msra.mxu0 %v967
    %1004 = vmatprep.subr.bf16.mxu0 0
    %1005 = vmatpush1.bf16.msra.mxu0 %v968
    %1006 = vmatprep.subr.bf16.mxu0 0
    %1007 = vmatpush1.bf16.msra.mxu0 %v969
    %1008 = vmatprep.subr.bf16.mxu0 0
    %1009 = vmatpush1.bf16.msra.mxu0 %v970
    %1010 = vmatprep.subr.bf16.mxu0 0
    %1011 = vmatpush1.bf16.msra.mxu0 %v971
    %1012 = vmatprep.subr.bf16.mxu0 0
    %1013 = vmatpush1.bf16.msra.mxu0 %v972
    %1014 = vmatprep.subr.bf16.mxu0 0
    %1015 = vmatpush1.bf16.msra.mxu0 %v973
    %1016 = vmatprep.subr.bf16.mxu0 0
    %1017 = vmatpush1.bf16.msra.mxu0 %v974
    %1018 = vmatprep.subr.bf16.mxu0 0
    %1019 = vmatpush1.bf16.msra.mxu0 %v975
    %1020 = vmatprep.subr.bf16.mxu0 0
    %1021 = vmatpush1.bf16.msra.mxu0 %v976
    %1022 = vmatprep.subr.bf16.mxu0 0
    %1023 = vmatpush1.bf16.msra.mxu0 %v977
    %1024 = vmatprep.subr.bf16.mxu0 0
    %1025 = vmatpush1.bf16.msra.mxu0 %v978
    %1026 = vmatprep.subr.bf16.mxu0 0
    %1027 = vmatpush1.bf16.msra.mxu0 %v979
    %1028 = vmatprep.mubr.bf16.mxu0 %v845
    %1029 = vmatmul.mubr.bf16.gmra.mrb[0].mxu0 %v445
    %v1030 = vpop.f32.mrb[0].mxu0
    %v1031 = vadd.f32 %v898, %v1030
    %v1032 = vpop.f32.mrb[0].mxu0
    %v1033 = vpop.f32.mrb[0].mxu0
    %v1034 = vadd.f32 %v898, %v1033
    %v1035 = vpop.f32.mrb[0].mxu0
    %1036 = vmatprep.mubr.bf16.mxu0 %v846
    %1037 = vmatmul.mubr.bf16.gmra.mrb[0].mxu0 %v446
    %v1038 = vpop.f32.mrb[0].mxu0
    %v1039 = vadd.f32 %v898, %v1038
    %v1040 = vpop.f32.mrb[0].mxu0
    %v1041 = vpop.f32.mrb[0].mxu0
    %v1042 = vadd.f32 %v898, %v1041
    %v1043 = vpop.f32.mrb[0].mxu0
    %1044 = vmatprep.mubr.bf16.mxu0 %v847
    %1045 = vmatmul.mubr.bf16.gmra.mrb[0].mxu0 %v447
    %v1046 = vpop.f32.mrb[0].mxu0
    %v1047 = vadd.f32 %v898, %v1046
    %v1048 = vpop.f32.mrb[0].mxu0
    %v1049 = vpop.f32.mrb[0].mxu0
    %v1050 = vadd.f32 %v898, %v1049
    %v1051 = vpop.f32.mrb[0].mxu0
    %1052 = vmatprep.mubr.bf16.mxu0 %v848
    %1053 = vmatmul.mubr.bf16.gmra.mrb[0].mxu0 %v448
    %v1054 = vpop.f32.mrb[0].mxu0
    %v1055 = vadd.f32 %v898, %v1054
    %v1056 = vpop.f32.mrb[0].mxu0
    %v1057 = vpop.f32.mrb[0].mxu0
    %v1058 = vadd.f32 %v898, %v1057
    %v1059 = vpop.f32.mrb[0].mxu0
    %1060 = vmatprep.mubr.bf16.mxu0 %v849
    %1061 = vmatmul.mubr.bf16.gmra.mrb[0].mxu0 %v449
    %v1062 = vpop.f32.mrb[0].mxu0
    %v1063 = vadd.f32 %v898, %v1062
    %v1064 = vpop.f32.mrb[0].mxu0
    %v1065 = vpop.f32.mrb[0].mxu0
    %v1066 = vadd.f32 %v898, %v1065
    %v1067 = vpop.f32.mrb[0].mxu0
    %1068 = vmatprep.mubr.bf16.mxu0 %v850
    %1069 = vmatmul.mubr.bf16.gmra.mrb[0].mxu0 %v450
    %v1070 = vpop.f32.mrb[0].mxu0
    %v1071 = vadd.f32 %v898, %v1070
    %v1072 = vpop.f32.mrb[0].mxu0
    %v1073 = vpop.f32.mrb[0].mxu0
    %v1074 = vadd.f32 %v898, %v1073
    %v1075 = vpop.f32.mrb[0].mxu0
    %1076 = vmatprep.mubr.bf16.mxu0 %v851
    %1077 = vmatmul.mubr.bf16.gmra.mrb[0].mxu0 %v451
    %v1078 = vpop.f32.mrb[0].mxu0
    %v1079 = vadd.f32 %v898, %v1078
    %v1080 = vpop.f32.mrb[0].mxu0
    %v1081 = vpop.f32.mrb[0].mxu0
    %v1082 = vadd.f32 %v898, %v1081
    %v1083 = vpop.f32.mrb[0].mxu0
    %1084 = vmatprep.mubr.bf16.mxu0 %v852
    %1085 = vmatmul.mubr.bf16.gmra.mrb[0].mxu0 %v452
    %v1086 = vpop.f32.mrb[0].mxu0
    %v1087 = vadd.f32 %v898, %v1086
    %v1088 = vpop.f32.mrb[0].mxu0
    %v1089 = vpop.f32.mrb[0].mxu0
    %v1090 = vadd.f32 %v898, %v1089
    %v1091 = vpop.f32.mrb[0].mxu0
    %1092 = vmatprep.mubr.bf16.mxu0 %v853
    %1093 = vmatmul.mubr.bf16.gmra.mrb[0].mxu0 %v453
    %v1094 = vpop.f32.mrb[0].mxu0
    %v1095 = vadd.f32 %v898, %v1094
    %v1096 = vpop.f32.mrb[0].mxu0
    %v1097 = vpop.f32.mrb[0].mxu0
    %v1098 = vadd.f32 %v898, %v1097
    %v1099 = vpop.f32.mrb[0].mxu0
    %1100 = vmatprep.mubr.bf16.mxu0 %v854
    %1101 = vmatmul.mubr.bf16.gmra.mrb[0].mxu0 %v454
    %v1102 = vpop.f32.mrb[0].mxu0
    %v1103 = vadd.f32 %v898, %v1102
    %v1104 = vpop.f32.mrb[0].mxu0
    %v1105 = vpop.f32.mrb[0].mxu0
    %v1106 = vadd.f32 %v898, %v1105
    %v1107 = vpop.f32.mrb[0].mxu0
    %1108 = vmatprep.mubr.bf16.mxu0 %v855
    %1109 = vmatmul.mubr.bf16.gmra.mrb[0].mxu0 %v455
    %v1110 = vpop.f32.mrb[0].mxu0
    %v1111 = vadd.f32 %v898, %v1110
    %v1112 = vpop.f32.mrb[0].mxu0
    %v1113 = vpop.f32.mrb[0].mxu0
    %v1114 = vadd.f32 %v898, %v1113
    %v1115 = vpop.f32.mrb[0].mxu0
    %1116 = vmatprep.mubr.bf16.mxu0 %v856
    %1117 = vmatmul.mubr.bf16.gmra.mrb[0].mxu0 %v456
    %v1118 = vpop.f32.mrb[0].mxu0
    %v1119 = vadd.f32 %v898, %v1118
    %v1120 = vpop.f32.mrb[0].mxu0
    %v1121 = vpop.f32.mrb[0].mxu0
    %v1122 = vadd.f32 %v898, %v1121
    %v1123 = vpop.f32.mrb[0].mxu0
    %1124 = vmatprep.mubr.bf16.mxu0 %v857
    %1125 = vmatmul.mubr.bf16.gmra.mrb[0].mxu0 %v457
    %v1126 = vpop.f32.mrb[0].mxu0
    %v1127 = vadd.f32 %v898, %v1126
    %v1128 = vpop.f32.mrb[0].mxu0
    %v1129 = vpop.f32.mrb[0].mxu0
    %v1130 = vadd.f32 %v898, %v1129
    %v1131 = vpop.f32.mrb[0].mxu0
    %1132 = vmatprep.mubr.bf16.mxu0 %v858
    %1133 = vmatmul.mubr.bf16.gmra.mrb[0].mxu0 %v458
    %v1134 = vpop.f32.mrb[0].mxu0
    %v1135 = vadd.f32 %v898, %v1134
    %v1136 = vpop.f32.mrb[0].mxu0
    %v1137 = vpop.f32.mrb[0].mxu0
    %v1138 = vadd.f32 %v898, %v1137
    %v1139 = vpop.f32.mrb[0].mxu0
    %1140 = vmatprep.mubr.bf16.mxu0 %v859
    %1141 = vmatmul.mubr.bf16.gmra.mrb[0].mxu0 %v459
    %v1142 = vpop.f32.mrb[0].mxu0
    %v1143 = vadd.f32 %v898, %v1142
    %v1144 = vpop.f32.mrb[0].mxu0
    %v1145 = vpop.f32.mrb[0].mxu0
    %v1146 = vadd.f32 %v898, %v1145
    %v1147 = vpop.f32.mrb[0].mxu0
    %1148 = vmatprep.mubr.bf16.mxu0 %v860
    %1149 = vmatmul.mubr.bf16.gmra.mrb[0].mxu0 %v460
    %v1150 = vpop.f32.mrb[0].mxu0
    %v1151 = vadd.f32 %v898, %v1150
    %v1152 = vpop.f32.mrb[0].mxu0
    %v1153 = vpop.f32.mrb[0].mxu0
    %v1154 = vadd.f32 %v898, %v1153
    %v1155 = vpop.f32.mrb[0].mxu0
    %1156 = vdwg.mxu0
    %1157 = vst [vmem:[#allocation8] sm:$0xff] %v1031
    %1158 = vst [vmem:[#allocation8 + $0x8] sm:$0xff] %v1034
    %1159 = vst [vmem:[#allocation8 + $0x10] sm:$0xff] %v1039
    %1160 = vst [vmem:[#allocation8 + $0x18] sm:$0xff] %v1042
    %1161 = vst [vmem:[#allocation8 + $0x20] sm:$0xff] %v1047
    %1162 = vst [vmem:[#allocation8 + $0x28] sm:$0xff] %v1050
    %1163 = vst [vmem:[#allocation8 + $0x30] sm:$0xff] %v1055
    %1164 = vst [vmem:[#allocation8 + $0x38] sm:$0xff] %v1058
    %1165 = vst [vmem:[#allocation8 + $0x40] sm:$0xff] %v1063
    %1166 = vst [vmem:[#allocation8 + $0x48] sm:$0xff] %v1066
    %1167 = vst [vmem:[#allocation8 + $0x50] sm:$0xff] %v1071
    %1168 = vst [vmem:[#allocation8 + $0x58] sm:$0xff] %v1074
    %1169 = vst [vmem:[#allocation8 + $0x60] sm:$0xff] %v1079
    %1170 = vst [vmem:[#allocation8 + $0x68] sm:$0xff] %v1082
    %1171 = vst [vmem:[#allocation8 + $0x70] sm:$0xff] %v1087
    %1172 = vst [vmem:[#allocation8 + $0x78] sm:$0xff] %v1090
    %1173 = vst [vmem:[#allocation8 + $0x80] sm:$0xff] %v1095
    %1174 = vst [vmem:[#allocation8 + $0x88] sm:$0xff] %v1098
    %1175 = vst [vmem:[#allocation8 + $0x90] sm:$0xff] %v1103
    %1176 = vst [vmem:[#allocation8 + $0x98] sm:$0xff] %v1106
    %1177 = vst [vmem:[#allocation8 + $0xa0] sm:$0xff] %v1111
    %1178 = vst [vmem:[#allocation8 + $0xa8] sm:$0xff] %v1114
    %1179 = vst [vmem:[#allocation8 + $0xb0] sm:$0xff] %v1119
    %1180 = vst [vmem:[#allocation8 + $0xb8] sm:$0xff] %v1122
    %1181 = vst [vmem:[#allocation8 + $0xc0] sm:$0xff] %v1127
    %1182 = vst [vmem:[#allocation8 + $0xc8] sm:$0xff] %v1130
    %1183 = vst [vmem:[#allocation8 + $0xd0] sm:$0xff] %v1135
    %1184 = vst [vmem:[#allocation8 + $0xd8] sm:$0xff] %v1138
    %1185 = vst [vmem:[#allocation8 + $0xe0] sm:$0xff] %v1143
    %1186 = vst [vmem:[#allocation8 + $0xe8] sm:$0xff] %v1146
    %1187 = vst [vmem:[#allocation8 + $0xf0] sm:$0xff] %v1151
    %1188 = vst [vmem:[#allocation8 + $0xf8] sm:$0xff] %v1154
    // Predicated region
    $region30: #{tpu_custom_call.1} parent=1 // pred_check
      _
    $region31: #{tpu_custom_call.1} parent=1 // pred_check_branch
      %1190 = sbr.rel (0) target = $region33
    $region32: #{tpu_custom_call.1} parent=1 // pred_region
      %s1192 = ssub.s32 4096, 4096
      %1193 = vsyncadd [#allocation4], %s1192
      %s1194 = sshll.u32 [#allocation8], 4
      %s1195 = int_to_ptr.vmem [resolvable:$true] %s1194
      %1200 = dma.vmem_to_hbm [thread:$0]  %s1195, 4096, %s4, [#allocation4], 128, 128, 8
    $region33: #{tpu_custom_call.1} parent=1 // pred_fallthru
      _
    // Predicated region
    $region34: #{tpu_custom_call.1} parent=1 // pred_check
      _
    $region35: #{tpu_custom_call.1} parent=1 // pred_check_branch
      %1202 = sbr.rel (0) target = $region37
    $region36: #{tpu_custom_call.1} parent=1 // pred_region
      %1203 = dma.done [#allocation4], 4096
    $region37: #{tpu_custom_call.1} parent=1 // pred_fallthru
      _
    %1204 = vsyncpa [#allocation3], 1
    %1205 = vsyncpa [#allocation6], 1
    %1206 = vsyncpa [#allocation4], 1

</llo_original>
